<compile_context>
chip_gen: v5e
topology: v5e:2x2
jax: 0.10.0
libtpu: 0.0.40
codegen_flags: <defaults>
</compile_context>

<pallas_src>
import jax
import jax.numpy as jnp
from jax.experimental import pallas as pl
from jax.experimental.pallas import tpu as pltpu


def decoder_rnn_kernel(x_ref, wih_ref, whh_ref, b_ref, wout_ref, bout_ref,
                       out_ref):
    # Shapes (per grid point, all padded / aligned by the wrapper):
    #   x_ref:     (seq*B_TILE, feat_p)   time-major within the batch tile
    #   wih_ref:   (feat_p, 4H)
    #   whh_ref:   (H, 4H)
    #   b_ref:     (1, 4H)                b_ih + b_hh
    #   wout_ref:  (H, 128)               fused out1@out2, zero-padded lanes
    #   bout_ref:  (1, 128)
    #   out_ref:   (B_TILE, 128)
    bt = out_ref.shape[0]
    H = whh_ref.shape[0]
    seq = x_ref.shape[0] // bt

    whh = whh_ref[...]  # (H, 4H), held in vregs across the unrolled loop

    # --- Hoisted input projection: ONE MXU push for all timesteps (no scratch). ---
    gates_x = (
        jnp.dot(x_ref[...], wih_ref[...], preferred_element_type=jnp.float32)
        + b_ref[...]
    )  # (seq*B_TILE, 4H), stays in vregs

    def gate_split(gates):
        sig = jax.nn.sigmoid(gates)   # 1 full-vreg EUP push
        th = jnp.tanh(gates)          # 1 full-vreg EUP push
        return sig[:, 0:H], sig[:, H:2 * H], th[:, 2 * H:3 * H], sig[:, 3 * H:4 * H]

    # --- Peeled t=0: h0 = c0 = 0 -> no recurrent matmul, c = i*g, h = o*tanh(c). ---
    i_g, _f_g, g_g, o_g = gate_split(gates_x[0:bt, :])
    c = i_g * g_g
    h = o_g * jnp.tanh(c)

    # --- t = 1..seq-1: only the h @ W_hh matmul stays on the serial chain. ---
    for t in range(1, seq):
        g_x = gates_x[t * bt:(t + 1) * bt, :]            # static slice (unrolled)
        gates = g_x + jnp.dot(h, whh, preferred_element_type=jnp.float32)
        i_g, f_g, g_g, o_g = gate_split(gates)
        c = f_g * c + i_g * g_g
        h = o_g * jnp.tanh(c)

    # --- Fused output head: single (B_TILE,H)@(H,128) matmul, lane-dense store. ---
    out_ref[...] = (
        jnp.dot(h, wout_ref[...], preferred_element_type=jnp.float32)
        + bout_ref[...]
    )


def decoder_rnn_forward(input_traj, params):
    """input_traj: (batch, seq, feat) float32 -> (batch, 16) float32.

    Stack as many independent trajectories as you like into the batch dim:
    they are processed by a single pallas_call, tiled over a parallel batch
    grid (splits across both TensorCores on v7x, no-op on v5e/v6e).
    """
    batch, seq, feat = input_traj.shape
    H = params["w_hh"].shape[1]
    four_h = 4 * H

    feat_p = max(8, ((feat + 7) // 8) * 8)           # 11 -> 16, NOT 128
    out_p = 128                                      # lane-dense output slab

    batch_8 = max(8, ((batch + 7) // 8) * 8)
    b_tile = min(batch_8, 128)                       # batch rows per grid point
    batch_p = ((batch_8 + b_tile - 1) // b_tile) * b_tile
    n_tiles = batch_p // b_tile

    # (batch, seq, feat) -> (n_tiles, seq, b_tile, feat_p) -> flat rows per tile.
    x = jnp.pad(input_traj,
                ((0, batch_p - batch), (0, 0), (0, feat_p - feat)))
    x = x.reshape(n_tiles, b_tile, seq, feat_p)
    x = jnp.transpose(x, (0, 2, 1, 3))               # time-major within each tile
    x = x.reshape(n_tiles * seq * b_tile, feat_p)

    # LSTM weights in right-multiply layout; zero-pad K dim of W_ih (inert).
    wih_t = jnp.pad(params["w_ih"].T, ((0, feat_p - feat), (0, 0)))  # (feat_p,4H)
    whh_t = params["w_hh"].T                                         # (H, 4H)
    b_lstm = (params["b_ih"] + params["b_hh"]).reshape(1, four_h)    # (1, 4H)

    # Fuse out1/out2: (h@W1^T+b1)@W2^T+b2 == h@(W1^T W2^T) + (b1 W2^T + b2).
    w_fused = params["w1"].T @ params["w2"].T                        # (H, 16)
    b_fused = (params["b1"].reshape(1, -1) @ params["w2"].T
               + params["b2"].reshape(1, -1))                        # (1, 16)
    n_out = w_fused.shape[1]
    w_fused = jnp.pad(w_fused, ((0, 0), (0, out_p - n_out)))
    b_fused = jnp.pad(b_fused, ((0, 0), (0, out_p - n_out)))

    rows_per_tile = seq * b_tile
    out = pl.pallas_call(
        decoder_rnn_kernel,
        out_shape=jax.ShapeDtypeStruct((batch_p, out_p), jnp.float32),
        grid=(n_tiles,),
        in_specs=[
            pl.BlockSpec((rows_per_tile, feat_p), lambda b: (b, 0)),
            pl.BlockSpec(wih_t.shape, lambda b: (0, 0)),
            pl.BlockSpec(whh_t.shape, lambda b: (0, 0)),
            pl.BlockSpec(b_lstm.shape, lambda b: (0, 0)),
            pl.BlockSpec(w_fused.shape, lambda b: (0, 0)),
            pl.BlockSpec(b_fused.shape, lambda b: (0, 0)),
        ],
        out_specs=pl.BlockSpec((b_tile, out_p), lambda b: (b, 0)),
        compiler_params=pltpu.CompilerParams(
            dimension_semantics=("parallel",)),
    )(x, wih_t, whh_t, b_lstm, w_fused, b_fused)

    return out[:batch, :n_out]


def make_params(key, num_hidden, input_size):
    # Deterministic, synthetic init (uniform, roughly matching torch default scale).
    ks = jax.random.split(key, 8)
    H = num_hidden
    s_lstm = 1.0 / jnp.sqrt(H)
    s1 = 1.0 / jnp.sqrt(H)
    s2 = 1.0 / jnp.sqrt(64)
    u = lambda k, shape, s: jax.random.uniform(k, shape, jnp.float32, -s, s)
    return {
        "w_ih": u(ks[0], (4 * H, input_size), s_lstm),
        "w_hh": u(ks[1], (4 * H, H), s_lstm),
        "b_ih": u(ks[2], (4 * H,), s_lstm),
        "b_hh": u(ks[3], (4 * H,), s_lstm),
        "w1": u(ks[4], (64, H), s1),
        "b1": u(ks[5], (64,), s1),
        "w2": u(ks[6], (16, 64), s2),
        "b2": u(ks[7], (16,), s2),
    }


def _reference_forward(input_traj, params):
    # Pure-JAX reference of the torch module's math (sanity check only).
    H = params["w_hh"].shape[1]
    x = jnp.transpose(input_traj, (1, 0, 2))
    b = params["b_ih"] + params["b_hh"]

    def step(carry, x_t):
        h, c = carry
        gates = x_t @ params["w_ih"].T + h @ params["w_hh"].T + b
        i = jax.nn.sigmoid(gates[:, 0:H])
        f = jax.nn.sigmoid(gates[:, H:2 * H])
        g = jnp.tanh(gates[:, 2 * H:3 * H])
        o = jax.nn.sigmoid(gates[:, 3 * H:4 * H])
        c = f * c + i * g
        h = o * jnp.tanh(c)
        return (h, c), None

    batch = input_traj.shape[0]
    h0 = jnp.zeros((batch, H), jnp.float32)
    c0 = jnp.zeros((batch, H), jnp.float32)
    (h, _), _ = jax.lax.scan(step, (h0, c0), x)
    y1 = h @ params["w1"].T + params["b1"]
    return y1 @ params["w2"].T + params["b2"]


if __name__ == "__main__":
    num_hidden = 32
    input_size = 11      # non-nuscenes branch of DecoderRNN.__init__
    batch, seq = 2, 8

    key = jax.random.PRNGKey(0)
    k_x, k_p, k_x2 = jax.random.split(key, 3)
    input_traj = jax.random.normal(k_x, (batch, seq, input_size), jnp.float32)
    params = make_params(k_p, num_hidden, input_size)

    out = jax.block_until_ready(decoder_rnn_forward(input_traj, params))
    ref = jax.block_until_ready(_reference_forward(input_traj, params))
    assert out.shape == (batch, 16)
    assert jnp.allclose(out, ref, atol=1e-4, rtol=1e-4)

    # Amortization / grid path: many stacked trajectories in ONE pallas_call
    # (multi-tile parallel batch grid; splits across TCs on v7x).
    big_batch = 200
    big_traj = jax.random.normal(k_x2, (big_batch, seq, input_size), jnp.float32)
    out_big = jax.block_until_ready(decoder_rnn_forward(big_traj, params))
    ref_big = jax.block_until_ready(_reference_forward(big_traj, params))
    assert out_big.shape == (big_batch, 16)
    assert jnp.allclose(out_big, ref_big, atol=1e-4, rtol=1e-4)

    print("KERNEL_OK")
</pallas_src>

<mosaic_0001>
module attributes {stable_mosaic.version = 11 : i64} {
  func.func @decoder_rnn_kernel(%arg0: i32, %arg1: memref<64x16xf32, #tpu.memory_space<vmem>>, %arg2: memref<16x128xf32, #tpu.memory_space<vmem>>, %arg3: memref<32x128xf32, #tpu.memory_space<vmem>>, %arg4: memref<1x128xf32, #tpu.memory_space<vmem>>, %arg5: memref<32x128xf32, #tpu.memory_space<vmem>>, %arg6: memref<1x128xf32, #tpu.memory_space<vmem>>, %arg7: memref<8x128xf32, #tpu.memory_space<vmem>>) attributes {dimension_semantics = [#tpu.dimension_semantics<parallel>], iteration_bounds = array<i64: 1>, scalar_prefetch = 0 : i64, scratch_operands = 0 : i64, tpu.core_type = #tpu.core_type<tc>, window_params = [{transform_indices = @transform_0, window_bounds = array<i64: 64, 16>}, {pipeline_mode = #tpu.pipeline_mode<synchronous>, transform_indices = @transform_1, window_bounds = array<i64: 16, 128>}, {pipeline_mode = #tpu.pipeline_mode<synchronous>, transform_indices = @transform_2, window_bounds = array<i64: 32, 128>}, {pipeline_mode = #tpu.pipeline_mode<synchronous>, transform_indices = @transform_3, window_bounds = array<i64: 1, 128>}, {pipeline_mode = #tpu.pipeline_mode<synchronous>, transform_indices = @transform_4, window_bounds = array<i64: 32, 128>}, {pipeline_mode = #tpu.pipeline_mode<synchronous>, transform_indices = @transform_5, window_bounds = array<i64: 1, 128>}, {transform_indices = @transform_6, window_bounds = array<i64: 8, 128>}]} {
    %c0 = arith.constant 0 : index
    %c0_0 = arith.constant 0 : index
    %0 = vector.load %arg3[%c0, %c0_0] : memref<32x128xf32, #tpu.memory_space<vmem>>, vector<32x128xf32>
    %c0_1 = arith.constant 0 : index
    %c0_2 = arith.constant 0 : index
    %1 = vector.load %arg1[%c0_1, %c0_2] : memref<64x16xf32, #tpu.memory_space<vmem>>, vector<64x16xf32>
    %c0_3 = arith.constant 0 : index
    %c0_4 = arith.constant 0 : index
    %2 = vector.load %arg2[%c0_3, %c0_4] : memref<16x128xf32, #tpu.memory_space<vmem>>, vector<16x128xf32>
    %cst = arith.constant dense<0.000000e+00> : vector<64x128xf32>
    %3 = tpu.matmul %1, %2, %cst {dimension_numbers = #tpu.dot_dimension_numbers<[1], [0], [0], [1], [0, 0, 1, 1], [], []>} : vector<64x16xf32>, vector<16x128xf32>, vector<64x128xf32> -> vector<64x128xf32>
    %c0_5 = arith.constant 0 : index
    %c0_6 = arith.constant 0 : index
    %4 = vector.load %arg4[%c0_5, %c0_6] : memref<1x128xf32, #tpu.memory_space<vmem>>, vector<1x128xf32>
    %5 = vector.broadcast %4 : vector<1x128xf32> to vector<64x128xf32>
    %6 = arith.addf %3, %5 : vector<64x128xf32>
    %7 = vector.extract_strided_slice %6 {offsets = [0, 0], sizes = [8, 128], strides = [1, 1]} : vector<64x128xf32> to vector<8x128xf32>
    %8 = arith.negf %7 : vector<8x128xf32>
    %9 = math.exp %8 : vector<8x128xf32>
    %cst_7 = arith.constant 1.000000e+00 : f32
    %10 = vector.broadcast %cst_7 : f32 to vector<8x128xf32>
    %11 = arith.addf %10, %9 : vector<8x128xf32>
    %12 = arith.divf %10, %11 : vector<8x128xf32>
    %13 = math.tanh %7 : vector<8x128xf32>
    %14 = vector.extract_strided_slice %12 {offsets = [0, 0], sizes = [8, 32], strides = [1, 1]} : vector<8x128xf32> to vector<8x32xf32>
    %15 = vector.extract_strided_slice %13 {offsets = [0, 64], sizes = [8, 32], strides = [1, 1]} : vector<8x128xf32> to vector<8x32xf32>
    %16 = vector.extract_strided_slice %12 {offsets = [0, 96], sizes = [8, 32], strides = [1, 1]} : vector<8x128xf32> to vector<8x32xf32>
    %17 = arith.mulf %14, %15 : vector<8x32xf32>
    %18 = math.tanh %17 : vector<8x32xf32>
    %19 = arith.mulf %16, %18 : vector<8x32xf32>
    %20 = vector.extract_strided_slice %6 {offsets = [8, 0], sizes = [8, 128], strides = [1, 1]} : vector<64x128xf32> to vector<8x128xf32>
    %cst_8 = arith.constant dense<0.000000e+00> : vector<8x128xf32>
    %21 = tpu.matmul %19, %0, %cst_8 {dimension_numbers = #tpu.dot_dimension_numbers<[1], [0], [0], [1], [0, 0, 1, 1], [], []>} : vector<8x32xf32>, vector<32x128xf32>, vector<8x128xf32> -> vector<8x128xf32>
    %22 = arith.addf %20, %21 : vector<8x128xf32>
    %23 = arith.negf %22 : vector<8x128xf32>
    %24 = math.exp %23 : vector<8x128xf32>
    %cst_9 = arith.constant 1.000000e+00 : f32
    %25 = vector.broadcast %cst_9 : f32 to vector<8x128xf32>
    %26 = arith.addf %25, %24 : vector<8x128xf32>
    %27 = arith.divf %25, %26 : vector<8x128xf32>
    %28 = math.tanh %22 : vector<8x128xf32>
    %29 = vector.extract_strided_slice %27 {offsets = [0, 0], sizes = [8, 32], strides = [1, 1]} : vector<8x128xf32> to vector<8x32xf32>
    %30 = vector.extract_strided_slice %27 {offsets = [0, 32], sizes = [8, 32], strides = [1, 1]} : vector<8x128xf32> to vector<8x32xf32>
    %31 = vector.extract_strided_slice %28 {offsets = [0, 64], sizes = [8, 32], strides = [1, 1]} : vector<8x128xf32> to vector<8x32xf32>
    %32 = vector.extract_strided_slice %27 {offsets = [0, 96], sizes = [8, 32], strides = [1, 1]} : vector<8x128xf32> to vector<8x32xf32>
    %33 = arith.mulf %30, %17 : vector<8x32xf32>
    %34 = arith.mulf %29, %31 : vector<8x32xf32>
    %35 = arith.addf %33, %34 : vector<8x32xf32>
    %36 = math.tanh %35 : vector<8x32xf32>
    %37 = arith.mulf %32, %36 : vector<8x32xf32>
    %38 = vector.extract_strided_slice %6 {offsets = [16, 0], sizes = [8, 128], strides = [1, 1]} : vector<64x128xf32> to vector<8x128xf32>
    %cst_10 = arith.constant dense<0.000000e+00> : vector<8x128xf32>
    %39 = tpu.matmul %37, %0, %cst_10 {dimension_numbers = #tpu.dot_dimension_numbers<[1], [0], [0], [1], [0, 0, 1, 1], [], []>} : vector<8x32xf32>, vector<32x128xf32>, vector<8x128xf32> -> vector<8x128xf32>
    %40 = arith.addf %38, %39 : vector<8x128xf32>
    %41 = arith.negf %40 : vector<8x128xf32>
    %42 = math.exp %41 : vector<8x128xf32>
    %cst_11 = arith.constant 1.000000e+00 : f32
    %43 = vector.broadcast %cst_11 : f32 to vector<8x128xf32>
    %44 = arith.addf %43, %42 : vector<8x128xf32>
    %45 = arith.divf %43, %44 : vector<8x128xf32>
    %46 = math.tanh %40 : vector<8x128xf32>
    %47 = vector.extract_strided_slice %45 {offsets = [0, 0], sizes = [8, 32], strides = [1, 1]} : vector<8x128xf32> to vector<8x32xf32>
    %48 = vector.extract_strided_slice %45 {offsets = [0, 32], sizes = [8, 32], strides = [1, 1]} : vector<8x128xf32> to vector<8x32xf32>
    %49 = vector.extract_strided_slice %46 {offsets = [0, 64], sizes = [8, 32], strides = [1, 1]} : vector<8x128xf32> to vector<8x32xf32>
    %50 = vector.extract_strided_slice %45 {offsets = [0, 96], sizes = [8, 32], strides = [1, 1]} : vector<8x128xf32> to vector<8x32xf32>
    %51 = arith.mulf %48, %35 : vector<8x32xf32>
    %52 = arith.mulf %47, %49 : vector<8x32xf32>
    %53 = arith.addf %51, %52 : vector<8x32xf32>
    %54 = math.tanh %53 : vector<8x32xf32>
    %55 = arith.mulf %50, %54 : vector<8x32xf32>
    %56 = vector.extract_strided_slice %6 {offsets = [24, 0], sizes = [8, 128], strides = [1, 1]} : vector<64x128xf32> to vector<8x128xf32>
    %cst_12 = arith.constant dense<0.000000e+00> : vector<8x128xf32>
    %57 = tpu.matmul %55, %0, %cst_12 {dimension_numbers = #tpu.dot_dimension_numbers<[1], [0], [0], [1], [0, 0, 1, 1], [], []>} : vector<8x32xf32>, vector<32x128xf32>, vector<8x128xf32> -> vector<8x128xf32>
    %58 = arith.addf %56, %57 : vector<8x128xf32>
    %59 = arith.negf %58 : vector<8x128xf32>
    %60 = math.exp %59 : vector<8x128xf32>
    %cst_13 = arith.constant 1.000000e+00 : f32
    %61 = vector.broadcast %cst_13 : f32 to vector<8x128xf32>
    %62 = arith.addf %61, %60 : vector<8x128xf32>
    %63 = arith.divf %61, %62 : vector<8x128xf32>
    %64 = math.tanh %58 : vector<8x128xf32>
    %65 = vector.extract_strided_slice %63 {offsets = [0, 0], sizes = [8, 32], strides = [1, 1]} : vector<8x128xf32> to vector<8x32xf32>
    %66 = vector.extract_strided_slice %63 {offsets = [0, 32], sizes = [8, 32], strides = [1, 1]} : vector<8x128xf32> to vector<8x32xf32>
    %67 = vector.extract_strided_slice %64 {offsets = [0, 64], sizes = [8, 32], strides = [1, 1]} : vector<8x128xf32> to vector<8x32xf32>
    %68 = vector.extract_strided_slice %63 {offsets = [0, 96], sizes = [8, 32], strides = [1, 1]} : vector<8x128xf32> to vector<8x32xf32>
    %69 = arith.mulf %66, %53 : vector<8x32xf32>
    %70 = arith.mulf %65, %67 : vector<8x32xf32>
    %71 = arith.addf %69, %70 : vector<8x32xf32>
    %72 = math.tanh %71 : vector<8x32xf32>
    %73 = arith.mulf %68, %72 : vector<8x32xf32>
    %74 = vector.extract_strided_slice %6 {offsets = [32, 0], sizes = [8, 128], strides = [1, 1]} : vector<64x128xf32> to vector<8x128xf32>
    %cst_14 = arith.constant dense<0.000000e+00> : vector<8x128xf32>
    %75 = tpu.matmul %73, %0, %cst_14 {dimension_numbers = #tpu.dot_dimension_numbers<[1], [0], [0], [1], [0, 0, 1, 1], [], []>} : vector<8x32xf32>, vector<32x128xf32>, vector<8x128xf32> -> vector<8x128xf32>
    %76 = arith.addf %74, %75 : vector<8x128xf32>
    %77 = arith.negf %76 : vector<8x128xf32>
    %78 = math.exp %77 : vector<8x128xf32>
    %cst_15 = arith.constant 1.000000e+00 : f32
    %79 = vector.broadcast %cst_15 : f32 to vector<8x128xf32>
    %80 = arith.addf %79, %78 : vector<8x128xf32>
    %81 = arith.divf %79, %80 : vector<8x128xf32>
    %82 = math.tanh %76 : vector<8x128xf32>
    %83 = vector.extract_strided_slice %81 {offsets = [0, 0], sizes = [8, 32], strides = [1, 1]} : vector<8x128xf32> to vector<8x32xf32>
    %84 = vector.extract_strided_slice %81 {offsets = [0, 32], sizes = [8, 32], strides = [1, 1]} : vector<8x128xf32> to vector<8x32xf32>
    %85 = vector.extract_strided_slice %82 {offsets = [0, 64], sizes = [8, 32], strides = [1, 1]} : vector<8x128xf32> to vector<8x32xf32>
    %86 = vector.extract_strided_slice %81 {offsets = [0, 96], sizes = [8, 32], strides = [1, 1]} : vector<8x128xf32> to vector<8x32xf32>
    %87 = arith.mulf %84, %71 : vector<8x32xf32>
    %88 = arith.mulf %83, %85 : vector<8x32xf32>
    %89 = arith.addf %87, %88 : vector<8x32xf32>
    %90 = math.tanh %89 : vector<8x32xf32>
    %91 = arith.mulf %86, %90 : vector<8x32xf32>
    %92 = vector.extract_strided_slice %6 {offsets = [40, 0], sizes = [8, 128], strides = [1, 1]} : vector<64x128xf32> to vector<8x128xf32>
    %cst_16 = arith.constant dense<0.000000e+00> : vector<8x128xf32>
    %93 = tpu.matmul %91, %0, %cst_16 {dimension_numbers = #tpu.dot_dimension_numbers<[1], [0], [0], [1], [0, 0, 1, 1], [], []>} : vector<8x32xf32>, vector<32x128xf32>, vector<8x128xf32> -> vector<8x128xf32>
    %94 = arith.addf %92, %93 : vector<8x128xf32>
    %95 = arith.negf %94 : vector<8x128xf32>
    %96 = math.exp %95 : vector<8x128xf32>
    %cst_17 = arith.constant 1.000000e+00 : f32
    %97 = vector.broadcast %cst_17 : f32 to vector<8x128xf32>
    %98 = arith.addf %97, %96 : vector<8x128xf32>
    %99 = arith.divf %97, %98 : vector<8x128xf32>
    %100 = math.tanh %94 : vector<8x128xf32>
    %101 = vector.extract_strided_slice %99 {offsets = [0, 0], sizes = [8, 32], strides = [1, 1]} : vector<8x128xf32> to vector<8x32xf32>
    %102 = vector.extract_strided_slice %99 {offsets = [0, 32], sizes = [8, 32], strides = [1, 1]} : vector<8x128xf32> to vector<8x32xf32>
    %103 = vector.extract_strided_slice %100 {offsets = [0, 64], sizes = [8, 32], strides = [1, 1]} : vector<8x128xf32> to vector<8x32xf32>
    %104 = vector.extract_strided_slice %99 {offsets = [0, 96], sizes = [8, 32], strides = [1, 1]} : vector<8x128xf32> to vector<8x32xf32>
    %105 = arith.mulf %102, %89 : vector<8x32xf32>
    %106 = arith.mulf %101, %103 : vector<8x32xf32>
    %107 = arith.addf %105, %106 : vector<8x32xf32>
    %108 = math.tanh %107 : vector<8x32xf32>
    %109 = arith.mulf %104, %108 : vector<8x32xf32>
    %110 = vector.extract_strided_slice %6 {offsets = [48, 0], sizes = [8, 128], strides = [1, 1]} : vector<64x128xf32> to vector<8x128xf32>
    %cst_18 = arith.constant dense<0.000000e+00> : vector<8x128xf32>
    %111 = tpu.matmul %109, %0, %cst_18 {dimension_numbers = #tpu.dot_dimension_numbers<[1], [0], [0], [1], [0, 0, 1, 1], [], []>} : vector<8x32xf32>, vector<32x128xf32>, vector<8x128xf32> -> vector<8x128xf32>
    %112 = arith.addf %110, %111 : vector<8x128xf32>
    %113 = arith.negf %112 : vector<8x128xf32>
    %114 = math.exp %113 : vector<8x128xf32>
    %cst_19 = arith.constant 1.000000e+00 : f32
    %115 = vector.broadcast %cst_19 : f32 to vector<8x128xf32>
    %116 = arith.addf %115, %114 : vector<8x128xf32>
    %117 = arith.divf %115, %116 : vector<8x128xf32>
    %118 = math.tanh %112 : vector<8x128xf32>
    %119 = vector.extract_strided_slice %117 {offsets = [0, 0], sizes = [8, 32], strides = [1, 1]} : vector<8x128xf32> to vector<8x32xf32>
    %120 = vector.extract_strided_slice %117 {offsets = [0, 32], sizes = [8, 32], strides = [1, 1]} : vector<8x128xf32> to vector<8x32xf32>
    %121 = vector.extract_strided_slice %118 {offsets = [0, 64], sizes = [8, 32], strides = [1, 1]} : vector<8x128xf32> to vector<8x32xf32>
    %122 = vector.extract_strided_slice %117 {offsets = [0, 96], sizes = [8, 32], strides = [1, 1]} : vector<8x128xf32> to vector<8x32xf32>
    %123 = arith.mulf %120, %107 : vector<8x32xf32>
    %124 = arith.mulf %119, %121 : vector<8x32xf32>
    %125 = arith.addf %123, %124 : vector<8x32xf32>
    %126 = math.tanh %125 : vector<8x32xf32>
    %127 = arith.mulf %122, %126 : vector<8x32xf32>
    %128 = vector.extract_strided_slice %6 {offsets = [56, 0], sizes = [8, 128], strides = [1, 1]} : vector<64x128xf32> to vector<8x128xf32>
    %cst_20 = arith.constant dense<0.000000e+00> : vector<8x128xf32>
    %129 = tpu.matmul %127, %0, %cst_20 {dimension_numbers = #tpu.dot_dimension_numbers<[1], [0], [0], [1], [0, 0, 1, 1], [], []>} : vector<8x32xf32>, vector<32x128xf32>, vector<8x128xf32> -> vector<8x128xf32>
    %130 = arith.addf %128, %129 : vector<8x128xf32>
    %131 = arith.negf %130 : vector<8x128xf32>
    %132 = math.exp %131 : vector<8x128xf32>
    %cst_21 = arith.constant 1.000000e+00 : f32
    %133 = vector.broadcast %cst_21 : f32 to vector<8x128xf32>
    %134 = arith.addf %133, %132 : vector<8x128xf32>
    %135 = arith.divf %133, %134 : vector<8x128xf32>
    %136 = math.tanh %130 : vector<8x128xf32>
    %137 = vector.extract_strided_slice %135 {offsets = [0, 0], sizes = [8, 32], strides = [1, 1]} : vector<8x128xf32> to vector<8x32xf32>
    %138 = vector.extract_strided_slice %135 {offsets = [0, 32], sizes = [8, 32], strides = [1, 1]} : vector<8x128xf32> to vector<8x32xf32>
    %139 = vector.extract_strided_slice %136 {offsets = [0, 64], sizes = [8, 32], strides = [1, 1]} : vector<8x128xf32> to vector<8x32xf32>
    %140 = vector.extract_strided_slice %135 {offsets = [0, 96], sizes = [8, 32], strides = [1, 1]} : vector<8x128xf32> to vector<8x32xf32>
    %141 = arith.mulf %138, %125 : vector<8x32xf32>
    %142 = arith.mulf %137, %139 : vector<8x32xf32>
    %143 = arith.addf %141, %142 : vector<8x32xf32>
    %144 = math.tanh %143 : vector<8x32xf32>
    %145 = arith.mulf %140, %144 : vector<8x32xf32>
    %c0_22 = arith.constant 0 : index
    %c0_23 = arith.constant 0 : index
    %146 = vector.load %arg5[%c0_22, %c0_23] : memref<32x128xf32, #tpu.memory_space<vmem>>, vector<32x128xf32>
    %cst_24 = arith.constant dense<0.000000e+00> : vector<8x128xf32>
    %147 = tpu.matmul %145, %146, %cst_24 {dimension_numbers = #tpu.dot_dimension_numbers<[1], [0], [0], [1], [0, 0, 1, 1], [], []>} : vector<8x32xf32>, vector<32x128xf32>, vector<8x128xf32> -> vector<8x128xf32>
    %c0_25 = arith.constant 0 : index
    %c0_26 = arith.constant 0 : index
    %148 = vector.load %arg6[%c0_25, %c0_26] : memref<1x128xf32, #tpu.memory_space<vmem>>, vector<1x128xf32>
    %149 = vector.broadcast %148 : vector<1x128xf32> to vector<8x128xf32>
    %150 = arith.addf %147, %149 : vector<8x128xf32>
    %c0_27 = arith.constant 0 : index
    %c0_28 = arith.constant 0 : index
    %151 = vector.load %arg7[%c0_27, %c0_28] : memref<8x128xf32, #tpu.memory_space<vmem>>, vector<8x128xf32>
    tpu.vector_store %arg7[%c0_27, %c0_28], %150 {strides = array<i32>} : memref<8x128xf32, #tpu.memory_space<vmem>>, vector<8x128xf32>,
    return
  }
  func.func @transform_0(%arg0: i32) -> (i32, i32) {
    %c0_i32 = arith.constant 0 : i32
    %c0_i32_0 = arith.constant 0 : i32
    return %arg0, %c0_i32 : i32, i32
  }
  func.func @transform_1(%arg0: i32) -> (i32, i32) {
    %c0_i32 = arith.constant 0 : i32
    %c0_i32_0 = arith.constant 0 : i32
    %c0_i32_1 = arith.constant 0 : i32
    return %c0_i32, %c0_i32_0 : i32, i32
  }
  func.func @transform_2(%arg0: i32) -> (i32, i32) {
    %c0_i32 = arith.constant 0 : i32
    %c0_i32_0 = arith.constant 0 : i32
    %c0_i32_1 = arith.constant 0 : i32
    return %c0_i32, %c0_i32_0 : i32, i32
  }
  func.func @transform_3(%arg0: i32) -> (i32, i32) {
    %c0_i32 = arith.constant 0 : i32
    %c0_i32_0 = arith.constant 0 : i32
    %c0_i32_1 = arith.constant 0 : i32
    return %c0_i32, %c0_i32_0 : i32, i32
  }
  func.func @transform_4(%arg0: i32) -> (i32, i32) {
    %c0_i32 = arith.constant 0 : i32
    %c0_i32_0 = arith.constant 0 : i32
    %c0_i32_1 = arith.constant 0 : i32
    return %c0_i32, %c0_i32_0 : i32, i32
  }
  func.func @transform_5(%arg0: i32) -> (i32, i32) {
    %c0_i32 = arith.constant 0 : i32
    %c0_i32_0 = arith.constant 0 : i32
    %c0_i32_1 = arith.constant 0 : i32
    return %c0_i32, %c0_i32_0 : i32, i32
  }
  func.func @transform_6(%arg0: i32) -> (i32, i32) {
    %c0_i32 = arith.constant 0 : i32
    %c0_i32_0 = arith.constant 0 : i32
    return %arg0, %c0_i32 : i32, i32
  }
}

</mosaic_0001>

<llo_original>
// kernel: tpu_custom_call.1
$region0: #{tpu_custom_call.1}
  #allocation0 [shape = 'u32[]', space=smem, size = 0x4, offset = 0x4, fixed_abs, tag = 'smem constant byte address 0x4 - core index']
  #allocation1 [shape = 'u32[72,128]{1,0:T(1,128)}', space=vmem, size = 0x9000, scoped, tag = 'internal scratch']
  %s0 = inlined_call_operand.vmem [shape: f32[64,16], index: 0, kind: input, shape index: {}]
  %s1 = inlined_call_operand.vmem [shape: f32[16,128], index: 1, kind: input, shape index: {}]
  %s2 = inlined_call_operand.vmem [shape: f32[32,128], index: 2, kind: input, shape index: {}]
  %s3 = inlined_call_operand.vmem [shape: f32[1,128], index: 3, kind: input, shape index: {}]
  %s4 = inlined_call_operand.vmem [shape: f32[32,128], index: 4, kind: input, shape index: {}]
  %s5 = inlined_call_operand.vmem [shape: f32[1,128], index: 5, kind: input, shape index: {}]
  %s6 = inlined_call_operand.hbm [shape: f32[8,128], index: 6, kind: output, shape index: {}]
  %s7 = sld [smem:[#allocation0]]
  $region34: #{tpu_custom_call.1} parent=0
    _
  %s9 = ssub.s32 1, %s7
  %s10 = scalar_select 0, %s9, %s7
  $region1: #{tpu_custom_call.1} parent=0
    #allocation2 [shape = 'u8[4096]{0}', space=vmem, size = 0x1000, scoped, tag = 'output window, operand 0, single buffered']
    #allocation3 [shape = 's32[1]{0}', space=sflag, size = 0x4, scoped, tag = 'scoped memory for tpu_custom_call.1']
    %11 = vsyncpa [#allocation3], 0
    // Predicated region
    $region2: #{tpu_custom_call.1} parent=1 // pred_check
      _
    $region3: #{tpu_custom_call.1} parent=1 // pred_check_branch
      %13 = sbr.rel (0) target = $region5
    $region4: #{tpu_custom_call.1} parent=1 // pred_region
      _
    $region5: #{tpu_custom_call.1} parent=1 // pred_fallthru
      _
    // Predicated region
    $region6: #{tpu_custom_call.1} parent=1 // pred_check
      _
    $region7: #{tpu_custom_call.1} parent=1 // pred_check_branch
      %15 = sbr.rel (0) target = $region9
    $region8: #{tpu_custom_call.1} parent=1 // pred_region
      _
    $region9: #{tpu_custom_call.1} parent=1 // pred_fallthru
      _
    // Predicated region
    $region10: #{tpu_custom_call.1} parent=1 // pred_check
      _
    $region11: #{tpu_custom_call.1} parent=1 // pred_check_branch
      %17 = sbr.rel (0) target = $region13
    $region12: #{tpu_custom_call.1} parent=1 // pred_region
      _
    $region13: #{tpu_custom_call.1} parent=1 // pred_fallthru
      _
    // Predicated region
    $region14: #{tpu_custom_call.1} parent=1 // pred_check
      _
    $region15: #{tpu_custom_call.1} parent=1 // pred_check_branch
      %19 = sbr.rel (0) target = $region17
    $region16: #{tpu_custom_call.1} parent=1 // pred_region
      _
    $region17: #{tpu_custom_call.1} parent=1 // pred_fallthru
      _
    // Predicated region
    $region18: #{tpu_custom_call.1} parent=1 // pred_check
      _
    $region19: #{tpu_custom_call.1} parent=1 // pred_check_branch
      %21 = sbr.rel (0) target = $region21
    $region20: #{tpu_custom_call.1} parent=1 // pred_region
      _
    $region21: #{tpu_custom_call.1} parent=1 // pred_fallthru
      _
    // Predicated region
    $region22: #{tpu_custom_call.1} parent=1 // pred_check
      _
    $region23: #{tpu_custom_call.1} parent=1 // pred_check_branch
      %23 = sbr.rel (0) target = $region25
    $region24: #{tpu_custom_call.1} parent=1 // pred_region
      _
    $region25: #{tpu_custom_call.1} parent=1 // pred_fallthru
      _
    %v24 = vld [vmem:[%s2] sm:$0xff]
    %v25 = vld [vmem:[%s2 + $0x8] sm:$0xff]
    %v26 = vld [vmem:[%s2 + $0x10] sm:$0xff]
    %v27 = vld [vmem:[%s2 + $0x18] sm:$0xff]
    %v28 = vld [vmem:[%s0] sm:$0xff]
    %v29 = vld [vmem:[%s0 + $0x8] sm:$0xff]
    %v30 = vld [vmem:[%s0 + $0x10] sm:$0xff]
    %v31 = vld [vmem:[%s0 + $0x18] sm:$0xff]
    %v32 = vld [vmem:[%s0 + $0x20] sm:$0xff]
    %v33 = vld [vmem:[%s0 + $0x28] sm:$0xff]
    %v34 = vld [vmem:[%s0 + $0x30] sm:$0xff]
    %v35 = vld [vmem:[%s0 + $0x38] sm:$0xff]
    %v36 = vld [vmem:[%s1] sm:$0xff]
    %v37 = vld [vmem:[%s1 + $0x8] sm:$0xff]
    %v38 = vld [vmem:[%s3] sm:$0x1]
    %v40 = vperm.slane %v38, 0
    %vm42 = vcmask 130048
    %v44 = vsel %vm42, %v28, 0
    %v47 = vsel %vm42, %v29, 0
    %v50 = vsel %vm42, %v30, 0
    %v53 = vsel %vm42, %v31, 0
    %v56 = vsel %vm42, %v32, 0
    %v59 = vsel %vm42, %v33, 0
    %v62 = vsel %vm42, %v34, 0
    %v65 = vsel %vm42, %v35, 0
    %67 = vmatpush.msra.mxu0 0.0
    %68 = vmatpush.msra.mxu0 0.0
    %69 = vmatpush.msra.mxu0 0.0
    %70 = vmatpush.msra.mxu0 0.0
    %71 = vmatpush.msra.mxu0 0.0
    %72 = vmatpush.msra.mxu0 0.0
    %73 = vmatpush.msra.mxu0 0.0
    %74 = vmatpush.msra.mxu0 0.0
    %75 = vmatpush.msra.mxu0 0.0
    %76 = vmatpush.msra.mxu0 0.0
    %77 = vmatpush.msra.mxu0 0.0
    %78 = vmatpush.msra.mxu0 0.0
    %79 = vmatpush.msra.mxu0 0.0
    %80 = vmatpush.msra.mxu0 0.0
    %81 = vmatpush.msra.mxu0 %v37
    %82 = vmatpush.msra.mxu0 %v36
    %83 = vmatmul.f32.gmra.mxu0 %v44
    %v84 = vpop.f32.mrf.mxu0
    %v85 = vadd.f32 %v40, %v84
    %86 = vmatmul.f32.gmra.mxu0 %v47
    %v87 = vpop.f32.mrf.mxu0
    %v88 = vadd.f32 %v40, %v87
    %89 = vmatmul.f32.gmra.mxu0 %v50
    %v90 = vpop.f32.mrf.mxu0
    %v91 = vadd.f32 %v40, %v90
    %92 = vmatmul.f32.gmra.mxu0 %v53
    %v93 = vpop.f32.mrf.mxu0
    %v94 = vadd.f32 %v40, %v93
    %95 = vmatmul.f32.gmra.mxu0 %v56
    %v96 = vpop.f32.mrf.mxu0
    %v97 = vadd.f32 %v40, %v96
    %98 = vmatmul.f32.gmra.mxu0 %v59
    %v99 = vpop.f32.mrf.mxu0
    %v100 = vadd.f32 %v40, %v99
    %101 = vmatmul.f32.gmra.mxu0 %v62
    %v102 = vpop.f32.mrf.mxu0
    %v103 = vadd.f32 %v40, %v102
    %104 = vmatmul.f32.gmra.mxu0 %v65
    %v105 = vpop.f32.mrf.mxu0
    %v106 = vadd.f32 %v40, %v105
    %107 = vdwg.mxu0
    %v108 = vxor.u32 %v85, 2147483648
    %v109 = vmul.f32 %v108, 1.442695
    %v110 = vpow.pop %v109
    %v111 = vadd.f32 %v110, 1.0
    %v112 = vrcp.pop %v111
    %v113 = vmul.f32 %v111, %v112
    %v114 = vsub.f32 1.0, %v113
    %v115 = vmul.f32 %v112, %v114
    %v116 = vadd.f32 %v112, %v115
    %vm117 = vweird.f32 %v111
    %vm118 = vweird.f32 %v112
    %vm119 = vmor %vm117, %vm118
    %v120 = vsel %vm119, %v112, %v116
    %v121 = vand.u32 2147483647, %v111
    %vm122 = vcmp.eq.f32.partialorder %v121, 8.507059e+37
    %v123 = vand.u32 %v111, 2147483648
    %v124 = vor.u32 1.1754944e-38, %v123
    %v125 = vsel %vm122, %v124, %v120
    %v126 = vmul.f32 1.0, %v125
    %v127 = vtanh.pop %v85
    %129 = vrot.lane.b32.xlu0 %v127, 64
    %v130 = vpop.permute.xlu0 %129
    %v132 = vmul.f32 %v126, %v130
    %v133 = vtanh.pop %v132
    %135 = vrot.lane.b32.xlu0 %v133, 96
    %v136 = vpop.permute.xlu0 %135
    %v138 = vmul.f32 %v126, %v136
    %140 = vrot.lane.b32.xlu0 %v138, 32
    %v141 = vpop.permute.xlu0 %140
    %vm142 = vcmask 261120
    %v143 = vsel %vm142, %v141, 0
    %145 = vmatpush.msra.mxu0 0.0
    %146 = vmatpush.msra.mxu0 0.0
    %147 = vmatpush.msra.mxu0 0.0
    %148 = vmatpush.msra.mxu0 0.0
    %149 = vmatpush.msra.mxu0 0.0
    %150 = vmatpush.msra.mxu0 0.0
    %151 = vmatpush.msra.mxu0 0.0
    %152 = vmatpush.msra.mxu0 0.0
    %153 = vmatpush.msra.mxu0 0.0
    %154 = vmatpush.msra.mxu0 0.0
    %155 = vmatpush.msra.mxu0 0.0
    %156 = vmatpush.msra.mxu0 0.0
    %157 = vmatpush.msra.mxu0 %v27
    %158 = vmatpush.msra.mxu0 %v26
    %159 = vmatpush.msra.mxu0 %v25
    %160 = vmatpush.msra.mxu0 %v24
    %161 = vmatmul.f32.gmra.mxu0 %v143
    %v162 = vpop.f32.mrf.mxu0
    %v163 = vadd.f32 0.0, %v162
    %164 = vdwg.mxu0
    %v165 = vadd.f32 %v88, %v163
    %v166 = vxor.u32 %v165, 2147483648
    %v167 = vmul.f32 %v166, 1.442695
    %v168 = vpow.pop %v167
    %v169 = vadd.f32 %v168, 1.0
    %v170 = vrcp.pop %v169
    %v171 = vmul.f32 %v169, %v170
    %v172 = vsub.f32 1.0, %v171
    %v173 = vmul.f32 %v170, %v172
    %v174 = vadd.f32 %v170, %v173
    %vm175 = vweird.f32 %v169
    %vm176 = vweird.f32 %v170
    %vm177 = vmor %vm175, %vm176
    %v178 = vsel %vm177, %v170, %v174
    %v179 = vand.u32 2147483647, %v169
    %vm180 = vcmp.eq.f32.partialorder %v179, 8.507059e+37
    %v181 = vand.u32 %v169, 2147483648
    %v182 = vor.u32 1.1754944e-38, %v181
    %v183 = vsel %vm180, %v182, %v178
    %v184 = vmul.f32 1.0, %v183
    %v185 = vtanh.pop %v165
    %187 = vrot.lane.b32.xlu0 %v132, 32
    %v188 = vpop.permute.xlu0 %187
    %v190 = vmul.f32 %v184, %v188
    %192 = vrot.lane.b32.xlu0 %v185, 64
    %v193 = vpop.permute.xlu0 %192
    %v195 = vmul.f32 %v184, %v193
    %197 = vrot.lane.b32.xlu0 %v195, 32
    %v198 = vpop.permute.xlu0 %197
    %v200 = vadd.f32 %v190, %v198
    %v201 = vtanh.pop %v200
    %203 = vrot.lane.b32.xlu0 %v201, 64
    %v204 = vpop.permute.xlu0 %203
    %v206 = vmul.f32 %v184, %v204
    %208 = vrot.lane.b32.xlu0 %v206, 32
    %v209 = vpop.permute.xlu0 %208
    %v210 = vsel %vm142, %v209, 0
    %212 = vmatpush.msra.mxu0 0.0
    %213 = vmatpush.msra.mxu0 0.0
    %214 = vmatpush.msra.mxu0 0.0
    %215 = vmatpush.msra.mxu0 0.0
    %216 = vmatpush.msra.mxu0 0.0
    %217 = vmatpush.msra.mxu0 0.0
    %218 = vmatpush.msra.mxu0 0.0
    %219 = vmatpush.msra.mxu0 0.0
    %220 = vmatpush.msra.mxu0 0.0
    %221 = vmatpush.msra.mxu0 0.0
    %222 = vmatpush.msra.mxu0 0.0
    %223 = vmatpush.msra.mxu0 0.0
    %224 = vmatpush.msra.mxu0 %v27
    %225 = vmatpush.msra.mxu0 %v26
    %226 = vmatpush.msra.mxu0 %v25
    %227 = vmatpush.msra.mxu0 %v24
    %228 = vmatmul.f32.gmra.mxu0 %v210
    %v229 = vpop.f32.mrf.mxu0
    %v230 = vadd.f32 0.0, %v229
    %231 = vdwg.mxu0
    %v232 = vadd.f32 %v91, %v230
    %v233 = vxor.u32 %v232, 2147483648
    %v234 = vmul.f32 %v233, 1.442695
    %v235 = vpow.pop %v234
    %v236 = vadd.f32 %v235, 1.0
    %v237 = vrcp.pop %v236
    %v238 = vmul.f32 %v236, %v237
    %v239 = vsub.f32 1.0, %v238
    %v240 = vmul.f32 %v237, %v239
    %v241 = vadd.f32 %v237, %v240
    %vm242 = vweird.f32 %v236
    %vm243 = vweird.f32 %v237
    %vm244 = vmor %vm242, %vm243
    %v245 = vsel %vm244, %v237, %v241
    %v246 = vand.u32 2147483647, %v236
    %vm247 = vcmp.eq.f32.partialorder %v246, 8.507059e+37
    %v248 = vand.u32 %v236, 2147483648
    %v249 = vor.u32 1.1754944e-38, %v248
    %v250 = vsel %vm247, %v249, %v245
    %v251 = vmul.f32 1.0, %v250
    %v252 = vtanh.pop %v232
    %v253 = vmul.f32 %v251, %v200
    %255 = vrot.lane.b32.xlu0 %v252, 64
    %v256 = vpop.permute.xlu0 %255
    %v258 = vmul.f32 %v251, %v256
    %260 = vrot.lane.b32.xlu0 %v258, 32
    %v261 = vpop.permute.xlu0 %260
    %v263 = vadd.f32 %v253, %v261
    %v264 = vtanh.pop %v263
    %266 = vrot.lane.b32.xlu0 %v264, 64
    %v267 = vpop.permute.xlu0 %266
    %v269 = vmul.f32 %v251, %v267
    %271 = vrot.lane.b32.xlu0 %v269, 32
    %v272 = vpop.permute.xlu0 %271
    %v273 = vsel %vm142, %v272, 0
    %275 = vmatpush.msra.mxu0 0.0
    %276 = vmatpush.msra.mxu0 0.0
    %277 = vmatpush.msra.mxu0 0.0
    %278 = vmatpush.msra.mxu0 0.0
    %279 = vmatpush.msra.mxu0 0.0
    %280 = vmatpush.msra.mxu0 0.0
    %281 = vmatpush.msra.mxu0 0.0
    %282 = vmatpush.msra.mxu0 0.0
    %283 = vmatpush.msra.mxu0 0.0
    %284 = vmatpush.msra.mxu0 0.0
    %285 = vmatpush.msra.mxu0 0.0
    %286 = vmatpush.msra.mxu0 0.0
    %287 = vmatpush.msra.mxu0 %v27
    %288 = vmatpush.msra.mxu0 %v26
    %289 = vmatpush.msra.mxu0 %v25
    %290 = vmatpush.msra.mxu0 %v24
    %291 = vmatmul.f32.gmra.mxu0 %v273
    %v292 = vpop.f32.mrf.mxu0
    %v293 = vadd.f32 0.0, %v292
    %294 = vdwg.mxu0
    %v295 = vadd.f32 %v94, %v293
    %v296 = vxor.u32 %v295, 2147483648
    %v297 = vmul.f32 %v296, 1.442695
    %v298 = vpow.pop %v297
    %v299 = vadd.f32 %v298, 1.0
    %v300 = vrcp.pop %v299
    %v301 = vmul.f32 %v299, %v300
    %v302 = vsub.f32 1.0, %v301
    %v303 = vmul.f32 %v300, %v302
    %v304 = vadd.f32 %v300, %v303
    %vm305 = vweird.f32 %v299
    %vm306 = vweird.f32 %v300
    %vm307 = vmor %vm305, %vm306
    %v308 = vsel %vm307, %v300, %v304
    %v309 = vand.u32 2147483647, %v299
    %vm310 = vcmp.eq.f32.partialorder %v309, 8.507059e+37
    %v311 = vand.u32 %v299, 2147483648
    %v312 = vor.u32 1.1754944e-38, %v311
    %v313 = vsel %vm310, %v312, %v308
    %v314 = vmul.f32 1.0, %v313
    %v315 = vtanh.pop %v295
    %v316 = vmul.f32 %v314, %v263
    %318 = vrot.lane.b32.xlu0 %v315, 64
    %v319 = vpop.permute.xlu0 %318
    %v321 = vmul.f32 %v314, %v319
    %323 = vrot.lane.b32.xlu0 %v321, 32
    %v324 = vpop.permute.xlu0 %323
    %v326 = vadd.f32 %v316, %v324
    %v327 = vtanh.pop %v326
    %329 = vrot.lane.b32.xlu0 %v327, 64
    %v330 = vpop.permute.xlu0 %329
    %v332 = vmul.f32 %v314, %v330
    %334 = vrot.lane.b32.xlu0 %v332, 32
    %v335 = vpop.permute.xlu0 %334
    %v336 = vsel %vm142, %v335, 0
    %338 = vmatpush.msra.mxu0 0.0
    %339 = vmatpush.msra.mxu0 0.0
    %340 = vmatpush.msra.mxu0 0.0
    %341 = vmatpush.msra.mxu0 0.0
    %342 = vmatpush.msra.mxu0 0.0
    %343 = vmatpush.msra.mxu0 0.0
    %344 = vmatpush.msra.mxu0 0.0
    %345 = vmatpush.msra.mxu0 0.0
    %346 = vmatpush.msra.mxu0 0.0
    %347 = vmatpush.msra.mxu0 0.0
    %348 = vmatpush.msra.mxu0 0.0
    %349 = vmatpush.msra.mxu0 0.0
    %350 = vmatpush.msra.mxu0 %v27
    %351 = vmatpush.msra.mxu0 %v26
    %352 = vmatpush.msra.mxu0 %v25
    %353 = vmatpush.msra.mxu0 %v24
    %354 = vmatmul.f32.gmra.mxu0 %v336
    %v355 = vpop.f32.mrf.mxu0
    %v356 = vadd.f32 0.0, %v355
    %357 = vdwg.mxu0
    %v358 = vadd.f32 %v97, %v356
    %v359 = vxor.u32 %v358, 2147483648
    %v360 = vmul.f32 %v359, 1.442695
    %v361 = vpow.pop %v360
    %v362 = vadd.f32 %v361, 1.0
    %v363 = vrcp.pop %v362
    %v364 = vmul.f32 %v362, %v363
    %v365 = vsub.f32 1.0, %v364
    %v366 = vmul.f32 %v363, %v365
    %v367 = vadd.f32 %v363, %v366
    %vm368 = vweird.f32 %v362
    %vm369 = vweird.f32 %v363
    %vm370 = vmor %vm368, %vm369
    %v371 = vsel %vm370, %v363, %v367
    %v372 = vand.u32 2147483647, %v362
    %vm373 = vcmp.eq.f32.partialorder %v372, 8.507059e+37
    %v374 = vand.u32 %v362, 2147483648
    %v375 = vor.u32 1.1754944e-38, %v374
    %v376 = vsel %vm373, %v375, %v371
    %v377 = vmul.f32 1.0, %v376
    %v378 = vtanh.pop %v358
    %v379 = vmul.f32 %v377, %v326
    %381 = vrot.lane.b32.xlu0 %v378, 64
    %v382 = vpop.permute.xlu0 %381
    %v384 = vmul.f32 %v377, %v382
    %386 = vrot.lane.b32.xlu0 %v384, 32
    %v387 = vpop.permute.xlu0 %386
    %v389 = vadd.f32 %v379, %v387
    %v390 = vtanh.pop %v389
    %392 = vrot.lane.b32.xlu0 %v390, 64
    %v393 = vpop.permute.xlu0 %392
    %v395 = vmul.f32 %v377, %v393
    %397 = vrot.lane.b32.xlu0 %v395, 32
    %v398 = vpop.permute.xlu0 %397
    %v399 = vsel %vm142, %v398, 0
    %401 = vmatpush.msra.mxu0 0.0
    %402 = vmatpush.msra.mxu0 0.0
    %403 = vmatpush.msra.mxu0 0.0
    %404 = vmatpush.msra.mxu0 0.0
    %405 = vmatpush.msra.mxu0 0.0
    %406 = vmatpush.msra.mxu0 0.0
    %407 = vmatpush.msra.mxu0 0.0
    %408 = vmatpush.msra.mxu0 0.0
    %409 = vmatpush.msra.mxu0 0.0
    %410 = vmatpush.msra.mxu0 0.0
    %411 = vmatpush.msra.mxu0 0.0
    %412 = vmatpush.msra.mxu0 0.0
    %413 = vmatpush.msra.mxu0 %v27
    %414 = vmatpush.msra.mxu0 %v26
    %415 = vmatpush.msra.mxu0 %v25
    %416 = vmatpush.msra.mxu0 %v24
    %417 = vmatmul.f32.gmra.mxu0 %v399
    %v418 = vpop.f32.mrf.mxu0
    %v419 = vadd.f32 0.0, %v418
    %420 = vdwg.mxu0
    %v421 = vadd.f32 %v100, %v419
    %v422 = vxor.u32 %v421, 2147483648
    %v423 = vmul.f32 %v422, 1.442695
    %v424 = vpow.pop %v423
    %v425 = vadd.f32 %v424, 1.0
    %v426 = vrcp.pop %v425
    %v427 = vmul.f32 %v425, %v426
    %v428 = vsub.f32 1.0, %v427
    %v429 = vmul.f32 %v426, %v428
    %v430 = vadd.f32 %v426, %v429
    %vm431 = vweird.f32 %v425
    %vm432 = vweird.f32 %v426
    %vm433 = vmor %vm431, %vm432
    %v434 = vsel %vm433, %v426, %v430
    %v435 = vand.u32 2147483647, %v425
    %vm436 = vcmp.eq.f32.partialorder %v435, 8.507059e+37
    %v437 = vand.u32 %v425, 2147483648
    %v438 = vor.u32 1.1754944e-38, %v437
    %v439 = vsel %vm436, %v438, %v434
    %v440 = vmul.f32 1.0, %v439
    %v441 = vtanh.pop %v421
    %v442 = vmul.f32 %v440, %v389
    %444 = vrot.lane.b32.xlu0 %v441, 64
    %v445 = vpop.permute.xlu0 %444
    %v447 = vmul.f32 %v440, %v445
    %449 = vrot.lane.b32.xlu0 %v447, 32
    %v450 = vpop.permute.xlu0 %449
    %v452 = vadd.f32 %v442, %v450
    %v453 = vtanh.pop %v452
    %455 = vrot.lane.b32.xlu0 %v453, 64
    %v456 = vpop.permute.xlu0 %455
    %v458 = vmul.f32 %v440, %v456
    %460 = vrot.lane.b32.xlu0 %v458, 32
    %v461 = vpop.permute.xlu0 %460
    %v462 = vsel %vm142, %v461, 0
    %464 = vmatpush.msra.mxu0 0.0
    %465 = vmatpush.msra.mxu0 0.0
    %466 = vmatpush.msra.mxu0 0.0
    %467 = vmatpush.msra.mxu0 0.0
    %468 = vmatpush.msra.mxu0 0.0
    %469 = vmatpush.msra.mxu0 0.0
    %470 = vmatpush.msra.mxu0 0.0
    %471 = vmatpush.msra.mxu0 0.0
    %472 = vmatpush.msra.mxu0 0.0
    %473 = vmatpush.msra.mxu0 0.0
    %474 = vmatpush.msra.mxu0 0.0
    %475 = vmatpush.msra.mxu0 0.0
    %476 = vmatpush.msra.mxu0 %v27
    %477 = vmatpush.msra.mxu0 %v26
    %478 = vmatpush.msra.mxu0 %v25
    %479 = vmatpush.msra.mxu0 %v24
    %480 = vmatmul.f32.gmra.mxu0 %v462
    %v481 = vpop.f32.mrf.mxu0
    %v482 = vadd.f32 0.0, %v481
    %483 = vdwg.mxu0
    %v484 = vadd.f32 %v103, %v482
    %v485 = vxor.u32 %v484, 2147483648
    %v486 = vmul.f32 %v485, 1.442695
    %v487 = vpow.pop %v486
    %v488 = vadd.f32 %v487, 1.0
    %v489 = vrcp.pop %v488
    %v490 = vmul.f32 %v488, %v489
    %v491 = vsub.f32 1.0, %v490
    %v492 = vmul.f32 %v489, %v491
    %v493 = vadd.f32 %v489, %v492
    %vm494 = vweird.f32 %v488
    %vm495 = vweird.f32 %v489
    %vm496 = vmor %vm494, %vm495
    %v497 = vsel %vm496, %v489, %v493
    %v498 = vand.u32 2147483647, %v488
    %vm499 = vcmp.eq.f32.partialorder %v498, 8.507059e+37
    %v500 = vand.u32 %v488, 2147483648
    %v501 = vor.u32 1.1754944e-38, %v500
    %v502 = vsel %vm499, %v501, %v497
    %v503 = vmul.f32 1.0, %v502
    %v504 = vtanh.pop %v484
    %v505 = vmul.f32 %v503, %v452
    %507 = vrot.lane.b32.xlu0 %v504, 64
    %v508 = vpop.permute.xlu0 %507
    %v510 = vmul.f32 %v503, %v508
    %512 = vrot.lane.b32.xlu0 %v510, 32
    %v513 = vpop.permute.xlu0 %512
    %v515 = vadd.f32 %v505, %v513
    %v516 = vtanh.pop %v515
    %518 = vrot.lane.b32.xlu0 %v516, 64
    %v519 = vpop.permute.xlu0 %518
    %v521 = vmul.f32 %v503, %v519
    %523 = vrot.lane.b32.xlu0 %v521, 32
    %v524 = vpop.permute.xlu0 %523
    %v525 = vsel %vm142, %v524, 0
    %527 = vmatpush.msra.mxu0 0.0
    %528 = vmatpush.msra.mxu0 0.0
    %529 = vmatpush.msra.mxu0 0.0
    %530 = vmatpush.msra.mxu0 0.0
    %531 = vmatpush.msra.mxu0 0.0
    %532 = vmatpush.msra.mxu0 0.0
    %533 = vmatpush.msra.mxu0 0.0
    %534 = vmatpush.msra.mxu0 0.0
    %535 = vmatpush.msra.mxu0 0.0
    %536 = vmatpush.msra.mxu0 0.0
    %537 = vmatpush.msra.mxu0 0.0
    %538 = vmatpush.msra.mxu0 0.0
    %539 = vmatpush.msra.mxu0 %v27
    %540 = vmatpush.msra.mxu0 %v26
    %541 = vmatpush.msra.mxu0 %v25
    %542 = vmatpush.msra.mxu0 %v24
    %543 = vmatmul.f32.gmra.mxu0 %v525
    %v544 = vpop.f32.mrf.mxu0
    %v545 = vadd.f32 0.0, %v544
    %546 = vdwg.mxu0
    %v547 = vadd.f32 %v106, %v545
    %v548 = vxor.u32 %v547, 2147483648
    %v549 = vmul.f32 %v548, 1.442695
    %v550 = vpow.pop %v549
    %v551 = vadd.f32 %v550, 1.0
    %v552 = vrcp.pop %v551
    %v553 = vmul.f32 %v551, %v552
    %v554 = vsub.f32 1.0, %v553
    %v555 = vmul.f32 %v552, %v554
    %v556 = vadd.f32 %v552, %v555
    %vm557 = vweird.f32 %v551
    %vm558 = vweird.f32 %v552
    %vm559 = vmor %vm557, %vm558
    %v560 = vsel %vm559, %v552, %v556
    %v561 = vand.u32 2147483647, %v551
    %vm562 = vcmp.eq.f32.partialorder %v561, 8.507059e+37
    %v563 = vand.u32 %v551, 2147483648
    %v564 = vor.u32 1.1754944e-38, %v563
    %v565 = vsel %vm562, %v564, %v560
    %v566 = vmul.f32 1.0, %v565
    %v567 = vtanh.pop %v547
    %v568 = vmul.f32 %v566, %v515
    %570 = vrot.lane.b32.xlu0 %v567, 64
    %v571 = vpop.permute.xlu0 %570
    %v573 = vmul.f32 %v566, %v571
    %575 = vrot.lane.b32.xlu0 %v573, 32
    %v576 = vpop.permute.xlu0 %575
    %v578 = vadd.f32 %v568, %v576
    %v579 = vtanh.pop %v578
    %581 = vrot.lane.b32.xlu0 %v579, 64
    %v582 = vpop.permute.xlu0 %581
    %v584 = vmul.f32 %v566, %v582
    %v585 = vld [vmem:[%s4] sm:$0xff]
    %v586 = vld [vmem:[%s4 + $0x8] sm:$0xff]
    %v587 = vld [vmem:[%s4 + $0x10] sm:$0xff]
    %v588 = vld [vmem:[%s4 + $0x18] sm:$0xff]
    %v589 = vld [vmem:[%s5] sm:$0x1]
    %v591 = vperm.slane %v589, 0
    %594 = vrot.lane.b32.xlu0 %v584, 32
    %v595 = vpop.permute.xlu0 %594
    %v596 = vsel %vm142, %v595, 0
    %598 = vmatpush.msra.mxu0 0.0
    %599 = vmatpush.msra.mxu0 0.0
    %600 = vmatpush.msra.mxu0 0.0
    %601 = vmatpush.msra.mxu0 0.0
    %602 = vmatpush.msra.mxu0 0.0
    %603 = vmatpush.msra.mxu0 0.0
    %604 = vmatpush.msra.mxu0 0.0
    %605 = vmatpush.msra.mxu0 0.0
    %606 = vmatpush.msra.mxu0 0.0
    %607 = vmatpush.msra.mxu0 0.0
    %608 = vmatpush.msra.mxu0 0.0
    %609 = vmatpush.msra.mxu0 0.0
    %610 = vmatpush.msra.mxu0 %v588
    %611 = vmatpush.msra.mxu0 %v587
    %612 = vmatpush.msra.mxu0 %v586
    %613 = vmatpush.msra.mxu0 %v585
    %614 = vmatmul.f32.gmra.mxu0 %v596
    %v615 = vpop.f32.mrf.mxu0
    %v616 = vadd.f32 %v591, %v615
    %617 = vdwg.mxu0
    %618 = vst [vmem:[#allocation2] sm:$0xff] %v616
    // Predicated region
    $region26: #{tpu_custom_call.1} parent=1 // pred_check
      _
    $region27: #{tpu_custom_call.1} parent=1 // pred_check_branch
      %620 = sbr.rel (0) target = $region29
    $region28: #{tpu_custom_call.1} parent=1 // pred_region
      %622 = vsyncadd [#allocation3], 0
      %s624 = sshll.u32 [#allocation2], 4
      %s625 = int_to_ptr.vmem [resolvable:$true] %s624
      %s626 = sshll.u32 %s6, 4
      %s627 = int_to_ptr.hbm [resolvable:$true] %s626
      %629 = dma.vmem_to_hbm [thread:$0]  %s625, 128, %s627, [#allocation3]
    $region29: #{tpu_custom_call.1} parent=1 // pred_fallthru
      _
    // Predicated region
    $region30: #{tpu_custom_call.1} parent=1 // pred_check
      _
    $region31: #{tpu_custom_call.1} parent=1 // pred_check_branch
      %631 = sbr.rel (0) target = $region33
    $region32: #{tpu_custom_call.1} parent=1 // pred_region
      %633 = dma.done [#allocation3], 128
    $region33: #{tpu_custom_call.1} parent=1 // pred_fallthru
      _
    %634 = vsyncpa [#allocation3], 1

</llo_original>
